<compile_context>
chip_gen: v5e
topology: v5e:2x2
jax: 0.10.0
libtpu: 0.0.40
codegen_flags: <defaults>
</compile_context>

<pallas_src>
import functools

import jax
import jax.numpy as jnp
from jax.experimental import pallas as pl
from jax.experimental.pallas import tpu as pltpu


IN_FEATURES = 28 * 28          # 784
HIDDEN = 256
OUT_FEATURES = 10
OUT_PADDED = 128               # lane-dense output width (>= OUT_FEATURES)


def _round_up(v, m):
    return (v + m - 1) // m * m


def _mlp_kernel(x_ref, w1_ref, b1_ref, w2_ref, b2_ref, o_ref):
    # fc1: (TM, 784) @ (784, 256) on the MXU, f32 accumulation.
    h = jnp.dot(x_ref[...], w1_ref[...], preferred_element_type=jnp.float32)
    # Bias + ReLU in f32 (v5e VPU has no bf16 elementwise path).
    h = jnp.maximum(h + b1_ref[...], 0.0)
    # fc2: (TM, 256) @ (256, 128); operands cast to the weight compute dtype.
    h = h.astype(w2_ref.dtype)
    out = jnp.dot(h, w2_ref[...], preferred_element_type=jnp.float32)
    o_ref[...] = (out + b2_ref[...]).astype(o_ref.dtype)


def prepare_params(w1, b1, w2, b2, *, compute_dtype=jnp.float32):
    """One-time layout prep (hoisted out of the per-call forward path).

    w1: (256, 784), b1: (256,), w2: (10, 256), b2: (10,)  -- PyTorch layout.
    Returns (w1_t, b1_2d, w2_t_pad, b2_pad):
      w1_t:     (784, 256) in compute_dtype
      b1_2d:    (1, 256)   f32
      w2_t_pad: (256, 128) in compute_dtype, cols 10.. are zero
      b2_pad:   (1, 128)   f32, cols 10.. are zero
    """
    w1_t = jnp.asarray(w1.T, dtype=compute_dtype)                       # (784, 256)
    b1_2d = jnp.asarray(b1, dtype=jnp.float32).reshape(1, HIDDEN)       # (1, 256)
    w2_t_pad = jnp.zeros((HIDDEN, OUT_PADDED), dtype=compute_dtype)
    w2_t_pad = w2_t_pad.at[:, :OUT_FEATURES].set(w2.T.astype(compute_dtype))
    b2_pad = jnp.zeros((1, OUT_PADDED), dtype=jnp.float32)
    b2_pad = b2_pad.at[:, :OUT_FEATURES].set(b2.astype(jnp.float32))
    return (w1_t, b1_2d, w2_t_pad, b2_pad)


def simple_net_forward(x_nchw, params, *, tm_max=512):
    """Forward pass of SimpleNet.

    x_nchw: (N, 1, 28, 28) float32
    params: output of prepare_params()
    returns logits (N, 10) float32
    """
    w1_t, b1_2d, w2_t, b2_2d = params
    n = x_nchw.shape[0]
    # Same as torch .view(-1, 784); cast to the matmul compute dtype.
    x = x_nchw.reshape(n, IN_FEATURES).astype(w1_t.dtype)

    # Tile the batch: TM kept <= 512 so double-buffered tiles fit comfortably
    # inside v7x's 64 MiB VMEM (as well as v5e/v6e); round small batches up
    # to a multiple of 8 (sublane granularity).
    tm = min(tm_max, _round_up(n, 8))
    n_pad = _round_up(n, tm)
    if n_pad != n:
        x = jnp.pad(x, ((0, n_pad - n), (0, 0)))
    grid = (n_pad // tm,)

    bytes_x = n_pad * IN_FEATURES * x.dtype.itemsize
    bytes_w = (IN_FEATURES * HIDDEN + HIDDEN * OUT_PADDED) * w1_t.dtype.itemsize
    bytes_o = n_pad * OUT_PADDED * 4
    cost = pl.CostEstimate(
        flops=2 * n_pad * (IN_FEATURES * HIDDEN + HIDDEN * OUT_PADDED),
        transcendentals=0,
        bytes_accessed=bytes_x + bytes_w + bytes_o,
    )

    out = pl.pallas_call(
        _mlp_kernel,
        out_shape=jax.ShapeDtypeStruct((n_pad, OUT_PADDED), jnp.float32),
        grid_spec=pltpu.PrefetchScalarGridSpec(
            num_scalar_prefetch=0,
            grid=grid,
            in_specs=[
                # Activation stream: tiled along batch -> software pipelined.
                pl.BlockSpec((tm, IN_FEATURES), lambda i: (i, 0)),
                # Weights / biases: constant index map -> stay resident.
                pl.BlockSpec((IN_FEATURES, HIDDEN), lambda i: (0, 0)),
                pl.BlockSpec((1, HIDDEN), lambda i: (0, 0)),
                pl.BlockSpec((HIDDEN, OUT_PADDED), lambda i: (0, 0)),
                pl.BlockSpec((1, OUT_PADDED), lambda i: (0, 0)),
            ],
            out_specs=pl.BlockSpec((tm, OUT_PADDED), lambda i: (i, 0)),
        ),
        compiler_params=pltpu.CompilerParams(
            # Batch tiles are independent -> shard across TCs on v7x megacore.
            dimension_semantics=("parallel",),
            vmem_limit_bytes=32 * 1024 * 1024,
        ),
        cost_estimate=cost,
    )(x, w1_t, b1_2d, w2_t, b2_2d)

    # Drop batch padding and the lane padding of the logits.
    return out[:n, :OUT_FEATURES]


def _ref_forward(x_nchw, w1, b1, w2, b2):
    n = x_nchw.shape[0]
    x = x_nchw.reshape(n, IN_FEATURES)
    h = jnp.maximum(x @ w1.T + b1, 0.0)
    return h @ w2.T + b2


if __name__ == "__main__":
    key = jax.random.PRNGKey(0)
    k_x, k_w1, k_b1, k_w2, k_b2 = jax.random.split(key, 5)

    batch = 8
    # Deterministic synthetic "MNIST" input, NCHW like PyTorch.
    x = jax.random.normal(k_x, (batch, 1, 28, 28), dtype=jnp.float32)

    # Deterministic parameter init (uniform, roughly matching nn.Linear scale).
    bound1 = 1.0 / (28 * 28) ** 0.5
    w1 = jax.random.uniform(k_w1, (256, 784), jnp.float32, -bound1, bound1)
    b1 = jax.random.uniform(k_b1, (256,), jnp.float32, -bound1, bound1)
    bound2 = 1.0 / 256 ** 0.5
    w2 = jax.random.uniform(k_w2, (10, 256), jnp.float32, -bound2, bound2)
    b2 = jax.random.uniform(k_b2, (10,), jnp.float32, -bound2, bound2)

    fwd = jax.jit(simple_net_forward, static_argnames=("tm_max",))

    # 1) f32 path, single batch tile.
    params_f32 = prepare_params(w1, b1, w2, b2, compute_dtype=jnp.float32)
    out = jax.block_until_ready(fwd(x, params_f32))
    ref = _ref_forward(x, w1, b1, w2, b2)
    assert out.shape == (batch, 10)
    assert jnp.allclose(out, ref, atol=1e-4, rtol=1e-4)

    # 2) Uneven batch with a small tile size -> exercises the pipelined
    #    multi-tile grid plus the padded last tile (N % TM != 0).
    batch2 = 50
    x2 = jax.random.normal(k_x, (batch2, 1, 28, 28), dtype=jnp.float32)
    out2 = jax.block_until_ready(fwd(x2, params_f32, tm_max=8))
    ref2 = _ref_forward(x2, w1, b1, w2, b2)
    assert out2.shape == (batch2, 10)
    assert jnp.allclose(out2, ref2, atol=1e-4, rtol=1e-4)

    # 3) bf16 matmul operands (f32 accumulation, f32 bias/ReLU) — looser tol.
    params_bf16 = prepare_params(w1, b1, w2, b2, compute_dtype=jnp.bfloat16)
    out3 = jax.block_until_ready(fwd(x, params_bf16))
    assert out3.shape == (batch, 10)
    assert jnp.allclose(out3, ref, atol=3e-2, rtol=3e-2)

    print("KERNEL_OK")
</pallas_src>

<mosaic_0001>
module attributes {stable_mosaic.version = 11 : i64} {
  func.func @_mlp_kernel(%arg0: i32, %arg1: memref<8x784xf32, #tpu.memory_space<vmem>>, %arg2: memref<784x256xf32, #tpu.memory_space<vmem>>, %arg3: memref<1x256xf32, #tpu.memory_space<vmem>>, %arg4: memref<256x128xf32, #tpu.memory_space<vmem>>, %arg5: memref<1x128xf32, #tpu.memory_space<vmem>>, %arg6: memref<8x128xf32, #tpu.memory_space<vmem>>) attributes {dimension_semantics = [#tpu.dimension_semantics<parallel>], iteration_bounds = array<i64: 1>, scalar_prefetch = 0 : i64, scratch_operands = 0 : i64, tpu.core_type = #tpu.core_type<tc>, window_params = [{transform_indices = @transform_0, window_bounds = array<i64: 8, 784>}, {pipeline_mode = #tpu.pipeline_mode<synchronous>, transform_indices = @transform_1, window_bounds = array<i64: 784, 256>}, {pipeline_mode = #tpu.pipeline_mode<synchronous>, transform_indices = @transform_2, window_bounds = array<i64: 1, 256>}, {pipeline_mode = #tpu.pipeline_mode<synchronous>, transform_indices = @transform_3, window_bounds = array<i64: 256, 128>}, {pipeline_mode = #tpu.pipeline_mode<synchronous>, transform_indices = @transform_4, window_bounds = array<i64: 1, 128>}, {transform_indices = @transform_5, window_bounds = array<i64: 8, 128>}]} {
    %c0 = arith.constant 0 : index
    %c0_0 = arith.constant 0 : index
    %0 = vector.load %arg1[%c0, %c0_0] : memref<8x784xf32, #tpu.memory_space<vmem>>, vector<8x784xf32>
    %c0_1 = arith.constant 0 : index
    %c0_2 = arith.constant 0 : index
    %1 = vector.load %arg2[%c0_1, %c0_2] : memref<784x256xf32, #tpu.memory_space<vmem>>, vector<784x256xf32>
    %cst = arith.constant dense<0.000000e+00> : vector<8x256xf32>
    %2 = tpu.matmul %0, %1, %cst {dimension_numbers = #tpu.dot_dimension_numbers<[1], [0], [0], [1], [0, 0, 1, 1], [], []>} : vector<8x784xf32>, vector<784x256xf32>, vector<8x256xf32> -> vector<8x256xf32>
    %c0_3 = arith.constant 0 : index
    %c0_4 = arith.constant 0 : index
    %3 = vector.load %arg3[%c0_3, %c0_4] : memref<1x256xf32, #tpu.memory_space<vmem>>, vector<1x256xf32>
    %4 = vector.broadcast %3 : vector<1x256xf32> to vector<8x256xf32>
    %5 = arith.addf %2, %4 : vector<8x256xf32>
    %cst_5 = arith.constant 0.000000e+00 : f32
    %6 = vector.broadcast %cst_5 : f32 to vector<8x256xf32>
    %7 = arith.maximumf %5, %6 : vector<8x256xf32>
    %c0_6 = arith.constant 0 : index
    %c0_7 = arith.constant 0 : index
    %8 = vector.load %arg4[%c0_6, %c0_7] : memref<256x128xf32, #tpu.memory_space<vmem>>, vector<256x128xf32>
    %cst_8 = arith.constant dense<0.000000e+00> : vector<8x128xf32>
    %9 = tpu.matmul %7, %8, %cst_8 {dimension_numbers = #tpu.dot_dimension_numbers<[1], [0], [0], [1], [0, 0, 1, 1], [], []>} : vector<8x256xf32>, vector<256x128xf32>, vector<8x128xf32> -> vector<8x128xf32>
    %c0_9 = arith.constant 0 : index
    %c0_10 = arith.constant 0 : index
    %10 = vector.load %arg5[%c0_9, %c0_10] : memref<1x128xf32, #tpu.memory_space<vmem>>, vector<1x128xf32>
    %11 = vector.broadcast %10 : vector<1x128xf32> to vector<8x128xf32>
    %12 = arith.addf %9, %11 : vector<8x128xf32>
    %c0_11 = arith.constant 0 : index
    %c0_12 = arith.constant 0 : index
    %13 = vector.load %arg6[%c0_11, %c0_12] : memref<8x128xf32, #tpu.memory_space<vmem>>, vector<8x128xf32>
    tpu.vector_store %arg6[%c0_11, %c0_12], %12 {strides = array<i32>} : memref<8x128xf32, #tpu.memory_space<vmem>>, vector<8x128xf32>,
    return
  }
  func.func @transform_0(%arg0: i32) -> (i32, i32) {
    %c0_i32 = arith.constant 0 : i32
    %c0_i32_0 = arith.constant 0 : i32
    return %arg0, %c0_i32 : i32, i32
  }
  func.func @transform_1(%arg0: i32) -> (i32, i32) {
    %c0_i32 = arith.constant 0 : i32
    %c0_i32_0 = arith.constant 0 : i32
    %c0_i32_1 = arith.constant 0 : i32
    return %c0_i32, %c0_i32_0 : i32, i32
  }
  func.func @transform_2(%arg0: i32) -> (i32, i32) {
    %c0_i32 = arith.constant 0 : i32
    %c0_i32_0 = arith.constant 0 : i32
    %c0_i32_1 = arith.constant 0 : i32
    return %c0_i32, %c0_i32_0 : i32, i32
  }
  func.func @transform_3(%arg0: i32) -> (i32, i32) {
    %c0_i32 = arith.constant 0 : i32
    %c0_i32_0 = arith.constant 0 : i32
    %c0_i32_1 = arith.constant 0 : i32
    return %c0_i32, %c0_i32_0 : i32, i32
  }
  func.func @transform_4(%arg0: i32) -> (i32, i32) {
    %c0_i32 = arith.constant 0 : i32
    %c0_i32_0 = arith.constant 0 : i32
    %c0_i32_1 = arith.constant 0 : i32
    return %c0_i32, %c0_i32_0 : i32, i32
  }
  func.func @transform_5(%arg0: i32) -> (i32, i32) {
    %c0_i32 = arith.constant 0 : i32
    %c0_i32_0 = arith.constant 0 : i32
    return %arg0, %c0_i32 : i32, i32
  }
}

</mosaic_0001>

<llo_original>
// kernel: simple_net_forward.1
$region0: #{simple_net_forward.1}
  #allocation0 [shape = 'u32[]', space=smem, size = 0x4, offset = 0x4, fixed_abs, tag = 'smem constant byte address 0x4 - core index']
  #allocation1 [shape = 'u32[72,128]{1,0:T(1,128)}', space=vmem, size = 0x9000, scoped, tag = 'internal scratch']
  %s0 = inlined_call_operand.vmem [shape: f32[8,784], index: 0, kind: input, shape index: {}]
  %s1 = inlined_call_operand.hbm [shape: f32[784,256], index: 1, kind: input, shape index: {}]
  %s2 = inlined_call_operand.vmem [shape: f32[1,256], index: 2, kind: input, shape index: {}]
  %s3 = inlined_call_operand.vmem [shape: f32[256,128], index: 3, kind: input, shape index: {}]
  %s4 = inlined_call_operand.vmem [shape: f32[1,128], index: 4, kind: input, shape index: {}]
  %s5 = inlined_call_operand.hbm [shape: f32[8,128], index: 5, kind: output, shape index: {}]
  %s6 = sld [smem:[#allocation0]]
  $region34: #{simple_net_forward.1} parent=0
    _
  %s8 = ssub.s32 1, %s6
  %s9 = scalar_select 0, %s8, %s6
  $region1: #{simple_net_forward.1} parent=0
    #allocation2 [shape = 'u8[802816]{0}', space=vmem, size = 0xc4000, scoped, tag = 'input window, operand 1, single buffered']
    #allocation3 [shape = 's32[1]{0}', space=sflag, size = 0x4, scoped, tag = 'scoped memory for simple_net_forward.1']
    #allocation4 [shape = 's32[1]{0}', space=sflag, size = 0x4, scoped, tag = 'scoped memory for simple_net_forward.1']
    #allocation5 [shape = 'u8[4096]{0}', space=vmem, size = 0x1000, scoped, tag = 'output window, operand 0, single buffered']
    %10 = vsyncpa [#allocation3], 0
    %11 = vsyncpa [#allocation4], 0
    // Predicated region
    $region2: #{simple_net_forward.1} parent=1 // pred_check
      _
    $region3: #{simple_net_forward.1} parent=1 // pred_check_branch
      %13 = sbr.rel (0) target = $region5
    $region4: #{simple_net_forward.1} parent=1 // pred_region
      _
    $region5: #{simple_net_forward.1} parent=1 // pred_fallthru
      _
    // Predicated region
    $region6: #{simple_net_forward.1} parent=1 // pred_check
      _
    $region7: #{simple_net_forward.1} parent=1 // pred_check_branch
      %15 = sbr.rel (0) target = $region9
    $region8: #{simple_net_forward.1} parent=1 // pred_region
      %17 = vsyncadd [#allocation3], 0
      %s18 = sshll.u32 %s1, 4
      %s19 = int_to_ptr.hbm [resolvable:$true] %s18
      %s20 = sshll.u32 [#allocation2], 4
      %s21 = int_to_ptr.vmem [resolvable:$true] %s20
      %26 = dma.hbm_to_vmem [thread:$0]  %s19, 25088, %s21, [#allocation3], 256, 256, 16
    $region9: #{simple_net_forward.1} parent=1 // pred_fallthru
      _
    // Predicated region
    $region10: #{simple_net_forward.1} parent=1 // pred_check
      _
    $region11: #{simple_net_forward.1} parent=1 // pred_check_branch
      %28 = sbr.rel (0) target = $region13
    $region12: #{simple_net_forward.1} parent=1 // pred_region
      _
    $region13: #{simple_net_forward.1} parent=1 // pred_fallthru
      _
    // Predicated region
    $region14: #{simple_net_forward.1} parent=1 // pred_check
      _
    $region15: #{simple_net_forward.1} parent=1 // pred_check_branch
      %30 = sbr.rel (0) target = $region17
    $region16: #{simple_net_forward.1} parent=1 // pred_region
      _
    $region17: #{simple_net_forward.1} parent=1 // pred_fallthru
      _
    // Predicated region
    $region18: #{simple_net_forward.1} parent=1 // pred_check
      _
    $region19: #{simple_net_forward.1} parent=1 // pred_check_branch
      %32 = sbr.rel (0) target = $region21
    $region20: #{simple_net_forward.1} parent=1 // pred_region
      _
    $region21: #{simple_net_forward.1} parent=1 // pred_fallthru
      _
    // Predicated region
    $region22: #{simple_net_forward.1} parent=1 // pred_check
      _
    $region23: #{simple_net_forward.1} parent=1 // pred_check_branch
      %34 = sbr.rel (0) target = $region25
    $region24: #{simple_net_forward.1} parent=1 // pred_region
      %36 = dma.done [#allocation3], 25088
    $region25: #{simple_net_forward.1} parent=1 // pred_fallthru
      _
    %v37 = vld [vmem:[%s0] sm:$0xff]
    %v38 = vld [vmem:[%s0 + $0x8] sm:$0xff]
    %v39 = vld [vmem:[%s0 + $0x10] sm:$0xff]
    %v40 = vld [vmem:[%s0 + $0x18] sm:$0xff]
    %v41 = vld [vmem:[%s0 + $0x20] sm:$0xff]
    %v42 = vld [vmem:[%s0 + $0x28] sm:$0xff]
    %v43 = vld [vmem:[%s0 + $0x30] sm:$0xff]
    %v44 = vld [vmem:[#allocation2] sm:$0xff]
    %v45 = vld [vmem:[#allocation2 + $0x8] sm:$0xff]
    %v46 = vld [vmem:[#allocation2 + $0x10] sm:$0xff]
    %v47 = vld [vmem:[#allocation2 + $0x18] sm:$0xff]
    %v48 = vld [vmem:[#allocation2 + $0x20] sm:$0xff]
    %v49 = vld [vmem:[#allocation2 + $0x28] sm:$0xff]
    %v50 = vld [vmem:[#allocation2 + $0x30] sm:$0xff]
    %v51 = vld [vmem:[#allocation2 + $0x38] sm:$0xff]
    %v52 = vld [vmem:[#allocation2 + $0x40] sm:$0xff]
    %v53 = vld [vmem:[#allocation2 + $0x48] sm:$0xff]
    %v54 = vld [vmem:[#allocation2 + $0x50] sm:$0xff]
    %v55 = vld [vmem:[#allocation2 + $0x58] sm:$0xff]
    %v56 = vld [vmem:[#allocation2 + $0x60] sm:$0xff]
    %v57 = vld [vmem:[#allocation2 + $0x68] sm:$0xff]
    %v58 = vld [vmem:[#allocation2 + $0x70] sm:$0xff]
    %v59 = vld [vmem:[#allocation2 + $0x78] sm:$0xff]
    %v60 = vld [vmem:[#allocation2 + $0x80] sm:$0xff]
    %v61 = vld [vmem:[#allocation2 + $0x88] sm:$0xff]
    %v62 = vld [vmem:[#allocation2 + $0x90] sm:$0xff]
    %v63 = vld [vmem:[#allocation2 + $0x98] sm:$0xff]
    %v64 = vld [vmem:[#allocation2 + $0xa0] sm:$0xff]
    %v65 = vld [vmem:[#allocation2 + $0xa8] sm:$0xff]
    %v66 = vld [vmem:[#allocation2 + $0xb0] sm:$0xff]
    %v67 = vld [vmem:[#allocation2 + $0xb8] sm:$0xff]
    %v68 = vld [vmem:[#allocation2 + $0xc0] sm:$0xff]
    %v69 = vld [vmem:[#allocation2 + $0xc8] sm:$0xff]
    %v70 = vld [vmem:[#allocation2 + $0xd0] sm:$0xff]
    %v71 = vld [vmem:[#allocation2 + $0xd8] sm:$0xff]
    %v72 = vld [vmem:[#allocation2 + $0xe0] sm:$0xff]
    %v73 = vld [vmem:[#allocation2 + $0xe8] sm:$0xff]
    %v74 = vld [vmem:[#allocation2 + $0xf0] sm:$0xff]
    %v75 = vld [vmem:[#allocation2 + $0xf8] sm:$0xff]
    %v76 = vld [vmem:[#allocation2 + $0x100] sm:$0xff]
    %v77 = vld [vmem:[#allocation2 + $0x108] sm:$0xff]
    %v78 = vld [vmem:[#allocation2 + $0x110] sm:$0xff]
    %v79 = vld [vmem:[#allocation2 + $0x118] sm:$0xff]
    %v80 = vld [vmem:[#allocation2 + $0x120] sm:$0xff]
    %v81 = vld [vmem:[#allocation2 + $0x128] sm:$0xff]
    %v82 = vld [vmem:[#allocation2 + $0x130] sm:$0xff]
    %v83 = vld [vmem:[#allocation2 + $0x138] sm:$0xff]
    %v84 = vld [vmem:[#allocation2 + $0x140] sm:$0xff]
    %v85 = vld [vmem:[#allocation2 + $0x148] sm:$0xff]
    %v86 = vld [vmem:[#allocation2 + $0x150] sm:$0xff]
    %v87 = vld [vmem:[#allocation2 + $0x158] sm:$0xff]
    %v88 = vld [vmem:[#allocation2 + $0x160] sm:$0xff]
    %v89 = vld [vmem:[#allocation2 + $0x168] sm:$0xff]
    %v90 = vld [vmem:[#allocation2 + $0x170] sm:$0xff]
    %v91 = vld [vmem:[#allocation2 + $0x178] sm:$0xff]
    %v92 = vld [vmem:[#allocation2 + $0x180] sm:$0xff]
    %v93 = vld [vmem:[#allocation2 + $0x188] sm:$0xff]
    %v94 = vld [vmem:[#allocation2 + $0x190] sm:$0xff]
    %v95 = vld [vmem:[#allocation2 + $0x198] sm:$0xff]
    %v96 = vld [vmem:[#allocation2 + $0x1a0] sm:$0xff]
    %v97 = vld [vmem:[#allocation2 + $0x1a8] sm:$0xff]
    %v98 = vld [vmem:[#allocation2 + $0x1b0] sm:$0xff]
    %v99 = vld [vmem:[#allocation2 + $0x1b8] sm:$0xff]
    %v100 = vld [vmem:[#allocation2 + $0x1c0] sm:$0xff]
    %v101 = vld [vmem:[#allocation2 + $0x1c8] sm:$0xff]
    %v102 = vld [vmem:[#allocation2 + $0x1d0] sm:$0xff]
    %v103 = vld [vmem:[#allocation2 + $0x1d8] sm:$0xff]
    %v104 = vld [vmem:[#allocation2 + $0x1e0] sm:$0xff]
    %v105 = vld [vmem:[#allocation2 + $0x1e8] sm:$0xff]
    %v106 = vld [vmem:[#allocation2 + $0x1f0] sm:$0xff]
    %v107 = vld [vmem:[#allocation2 + $0x1f8] sm:$0xff]
    %v108 = vld [vmem:[#allocation2 + $0x200] sm:$0xff]
    %v109 = vld [vmem:[#allocation2 + $0x208] sm:$0xff]
    %v110 = vld [vmem:[#allocation2 + $0x210] sm:$0xff]
    %v111 = vld [vmem:[#allocation2 + $0x218] sm:$0xff]
    %v112 = vld [vmem:[#allocation2 + $0x220] sm:$0xff]
    %v113 = vld [vmem:[#allocation2 + $0x228] sm:$0xff]
    %v114 = vld [vmem:[#allocation2 + $0x230] sm:$0xff]
    %v115 = vld [vmem:[#allocation2 + $0x238] sm:$0xff]
    %v116 = vld [vmem:[#allocation2 + $0x240] sm:$0xff]
    %v117 = vld [vmem:[#allocation2 + $0x248] sm:$0xff]
    %v118 = vld [vmem:[#allocation2 + $0x250] sm:$0xff]
    %v119 = vld [vmem:[#allocation2 + $0x258] sm:$0xff]
    %v120 = vld [vmem:[#allocation2 + $0x260] sm:$0xff]
    %v121 = vld [vmem:[#allocation2 + $0x268] sm:$0xff]
    %v122 = vld [vmem:[#allocation2 + $0x270] sm:$0xff]
    %v123 = vld [vmem:[#allocation2 + $0x278] sm:$0xff]
    %v124 = vld [vmem:[#allocation2 + $0x280] sm:$0xff]
    %v125 = vld [vmem:[#allocation2 + $0x288] sm:$0xff]
    %v126 = vld [vmem:[#allocation2 + $0x290] sm:$0xff]
    %v127 = vld [vmem:[#allocation2 + $0x298] sm:$0xff]
    %v128 = vld [vmem:[#allocation2 + $0x2a0] sm:$0xff]
    %v129 = vld [vmem:[#allocation2 + $0x2a8] sm:$0xff]
    %v130 = vld [vmem:[#allocation2 + $0x2b0] sm:$0xff]
    %v131 = vld [vmem:[#allocation2 + $0x2b8] sm:$0xff]
    %v132 = vld [vmem:[#allocation2 + $0x2c0] sm:$0xff]
    %v133 = vld [vmem:[#allocation2 + $0x2c8] sm:$0xff]
    %v134 = vld [vmem:[#allocation2 + $0x2d0] sm:$0xff]
    %v135 = vld [vmem:[#allocation2 + $0x2d8] sm:$0xff]
    %v136 = vld [vmem:[#allocation2 + $0x2e0] sm:$0xff]
    %v137 = vld [vmem:[#allocation2 + $0x2e8] sm:$0xff]
    %v138 = vld [vmem:[#allocation2 + $0x2f0] sm:$0xff]
    %v139 = vld [vmem:[#allocation2 + $0x2f8] sm:$0xff]
    %v140 = vld [vmem:[#allocation2 + $0x300] sm:$0xff]
    %v141 = vld [vmem:[#allocation2 + $0x308] sm:$0xff]
    %v142 = vld [vmem:[#allocation2 + $0x310] sm:$0xff]
    %v143 = vld [vmem:[#allocation2 + $0x318] sm:$0xff]
    %v144 = vld [vmem:[#allocation2 + $0x320] sm:$0xff]
    %v145 = vld [vmem:[#allocation2 + $0x328] sm:$0xff]
    %v146 = vld [vmem:[#allocation2 + $0x330] sm:$0xff]
    %v147 = vld [vmem:[#allocation2 + $0x338] sm:$0xff]
    %v148 = vld [vmem:[#allocation2 + $0x340] sm:$0xff]
    %v149 = vld [vmem:[#allocation2 + $0x348] sm:$0xff]
    %v150 = vld [vmem:[#allocation2 + $0x350] sm:$0xff]
    %v151 = vld [vmem:[#allocation2 + $0x358] sm:$0xff]
    %v152 = vld [vmem:[#allocation2 + $0x360] sm:$0xff]
    %v153 = vld [vmem:[#allocation2 + $0x368] sm:$0xff]
    %v154 = vld [vmem:[#allocation2 + $0x370] sm:$0xff]
    %v155 = vld [vmem:[#allocation2 + $0x378] sm:$0xff]
    %v156 = vld [vmem:[#allocation2 + $0x380] sm:$0xff]
    %v157 = vld [vmem:[#allocation2 + $0x388] sm:$0xff]
    %v158 = vld [vmem:[#allocation2 + $0x390] sm:$0xff]
    %v159 = vld [vmem:[#allocation2 + $0x398] sm:$0xff]
    %v160 = vld [vmem:[#allocation2 + $0x3a0] sm:$0xff]
    %v161 = vld [vmem:[#allocation2 + $0x3a8] sm:$0xff]
    %v162 = vld [vmem:[#allocation2 + $0x3b0] sm:$0xff]
    %v163 = vld [vmem:[#allocation2 + $0x3b8] sm:$0xff]
    %v164 = vld [vmem:[#allocation2 + $0x3c0] sm:$0xff]
    %v165 = vld [vmem:[#allocation2 + $0x3c8] sm:$0xff]
    %v166 = vld [vmem:[#allocation2 + $0x3d0] sm:$0xff]
    %v167 = vld [vmem:[#allocation2 + $0x3d8] sm:$0xff]
    %v168 = vld [vmem:[#allocation2 + $0x3e0] sm:$0xff]
    %v169 = vld [vmem:[#allocation2 + $0x3e8] sm:$0xff]
    %v170 = vld [vmem:[#allocation2 + $0x3f0] sm:$0xff]
    %v171 = vld [vmem:[#allocation2 + $0x3f8] sm:$0xff]
    %v172 = vld [vmem:[#allocation2 + $0x400] sm:$0xff]
    %v173 = vld [vmem:[#allocation2 + $0x408] sm:$0xff]
    %v174 = vld [vmem:[#allocation2 + $0x410] sm:$0xff]
    %v175 = vld [vmem:[#allocation2 + $0x418] sm:$0xff]
    %v176 = vld [vmem:[#allocation2 + $0x420] sm:$0xff]
    %v177 = vld [vmem:[#allocation2 + $0x428] sm:$0xff]
    %v178 = vld [vmem:[#allocation2 + $0x430] sm:$0xff]
    %v179 = vld [vmem:[#allocation2 + $0x438] sm:$0xff]
    %v180 = vld [vmem:[#allocation2 + $0x440] sm:$0xff]
    %v181 = vld [vmem:[#allocation2 + $0x448] sm:$0xff]
    %v182 = vld [vmem:[#allocation2 + $0x450] sm:$0xff]
    %v183 = vld [vmem:[#allocation2 + $0x458] sm:$0xff]
    %v184 = vld [vmem:[#allocation2 + $0x460] sm:$0xff]
    %v185 = vld [vmem:[#allocation2 + $0x468] sm:$0xff]
    %v186 = vld [vmem:[#allocation2 + $0x470] sm:$0xff]
    %v187 = vld [vmem:[#allocation2 + $0x478] sm:$0xff]
    %v188 = vld [vmem:[#allocation2 + $0x480] sm:$0xff]
    %v189 = vld [vmem:[#allocation2 + $0x488] sm:$0xff]
    %v190 = vld [vmem:[#allocation2 + $0x490] sm:$0xff]
    %v191 = vld [vmem:[#allocation2 + $0x498] sm:$0xff]
    %v192 = vld [vmem:[#allocation2 + $0x4a0] sm:$0xff]
    %v193 = vld [vmem:[#allocation2 + $0x4a8] sm:$0xff]
    %v194 = vld [vmem:[#allocation2 + $0x4b0] sm:$0xff]
    %v195 = vld [vmem:[#allocation2 + $0x4b8] sm:$0xff]
    %v196 = vld [vmem:[#allocation2 + $0x4c0] sm:$0xff]
    %v197 = vld [vmem:[#allocation2 + $0x4c8] sm:$0xff]
    %v198 = vld [vmem:[#allocation2 + $0x4d0] sm:$0xff]
    %v199 = vld [vmem:[#allocation2 + $0x4d8] sm:$0xff]
    %v200 = vld [vmem:[#allocation2 + $0x4e0] sm:$0xff]
    %v201 = vld [vmem:[#allocation2 + $0x4e8] sm:$0xff]
    %v202 = vld [vmem:[#allocation2 + $0x4f0] sm:$0xff]
    %v203 = vld [vmem:[#allocation2 + $0x4f8] sm:$0xff]
    %v204 = vld [vmem:[#allocation2 + $0x500] sm:$0xff]
    %v205 = vld [vmem:[#allocation2 + $0x508] sm:$0xff]
    %v206 = vld [vmem:[#allocation2 + $0x510] sm:$0xff]
    %v207 = vld [vmem:[#allocation2 + $0x518] sm:$0xff]
    %v208 = vld [vmem:[#allocation2 + $0x520] sm:$0xff]
    %v209 = vld [vmem:[#allocation2 + $0x528] sm:$0xff]
    %v210 = vld [vmem:[#allocation2 + $0x530] sm:$0xff]
    %v211 = vld [vmem:[#allocation2 + $0x538] sm:$0xff]
    %v212 = vld [vmem:[#allocation2 + $0x540] sm:$0xff]
    %v213 = vld [vmem:[#allocation2 + $0x548] sm:$0xff]
    %v214 = vld [vmem:[#allocation2 + $0x550] sm:$0xff]
    %v215 = vld [vmem:[#allocation2 + $0x558] sm:$0xff]
    %v216 = vld [vmem:[#allocation2 + $0x560] sm:$0xff]
    %v217 = vld [vmem:[#allocation2 + $0x568] sm:$0xff]
    %v218 = vld [vmem:[#allocation2 + $0x570] sm:$0xff]
    %v219 = vld [vmem:[#allocation2 + $0x578] sm:$0xff]
    %v220 = vld [vmem:[#allocation2 + $0x580] sm:$0xff]
    %v221 = vld [vmem:[#allocation2 + $0x588] sm:$0xff]
    %v222 = vld [vmem:[#allocation2 + $0x590] sm:$0xff]
    %v223 = vld [vmem:[#allocation2 + $0x598] sm:$0xff]
    %v224 = vld [vmem:[#allocation2 + $0x5a0] sm:$0xff]
    %v225 = vld [vmem:[#allocation2 + $0x5a8] sm:$0xff]
    %v226 = vld [vmem:[#allocation2 + $0x5b0] sm:$0xff]
    %v227 = vld [vmem:[#allocation2 + $0x5b8] sm:$0xff]
    %v228 = vld [vmem:[#allocation2 + $0x5c0] sm:$0xff]
    %v229 = vld [vmem:[#allocation2 + $0x5c8] sm:$0xff]
    %v230 = vld [vmem:[#allocation2 + $0x5d0] sm:$0xff]
    %v231 = vld [vmem:[#allocation2 + $0x5d8] sm:$0xff]
    %v232 = vld [vmem:[#allocation2 + $0x5e0] sm:$0xff]
    %v233 = vld [vmem:[#allocation2 + $0x5e8] sm:$0xff]
    %v234 = vld [vmem:[#allocation2 + $0x5f0] sm:$0xff]
    %v235 = vld [vmem:[#allocation2 + $0x5f8] sm:$0xff]
    %v236 = vld [vmem:[#allocation2 + $0x600] sm:$0xff]
    %v237 = vld [vmem:[#allocation2 + $0x608] sm:$0xff]
    %v238 = vld [vmem:[#allocation2 + $0x610] sm:$0xff]
    %v239 = vld [vmem:[#allocation2 + $0x618] sm:$0xff]
    %v240 = vld [vmem:[%s2] sm:$0x3]
    %v242 = vperm.slane %v240, 0
    %v243 = vperm.slane %v240, 1
    %vm246 = vcmask 130048
    %v248 = vsel %vm246, %v43, 0
    %250 = vmatpush.msra.mxu0 %v74
    %251 = vmatpush.msra.mxu0 %v72
    %252 = vmatpush.msra.mxu0 %v70
    %253 = vmatpush.msra.mxu0 %v68
    %254 = vmatpush.msra.mxu0 %v66
    %255 = vmatpush.msra.mxu0 %v64
    %256 = vmatpush.msra.mxu0 %v62
    %257 = vmatpush.msra.mxu0 %v60
    %258 = vmatpush.msra.mxu0 %v58
    %259 = vmatpush.msra.mxu0 %v56
    %260 = vmatpush.msra.mxu0 %v54
    %261 = vmatpush.msra.mxu0 %v52
    %262 = vmatpush.msra.mxu0 %v50
    %263 = vmatpush.msra.mxu0 %v48
    %264 = vmatpush.msra.mxu0 %v46
    %265 = vmatpush.msra.mxu0 %v44
    %266 = vmatmul.f32.gmra.mxu0 %v37
    %v267 = vpop.f32.mrf.mxu0
    %v268 = vadd.f32 %v242, %v267
    %269 = vdwg.mxu0
    %270 = vmatpush.msra.mxu0 %v106
    %271 = vmatpush.msra.mxu0 %v104
    %272 = vmatpush.msra.mxu0 %v102
    %273 = vmatpush.msra.mxu0 %v100
    %274 = vmatpush.msra.mxu0 %v98
    %275 = vmatpush.msra.mxu0 %v96
    %276 = vmatpush.msra.mxu0 %v94
    %277 = vmatpush.msra.mxu0 %v92
    %278 = vmatpush.msra.mxu0 %v90
    %279 = vmatpush.msra.mxu0 %v88
    %280 = vmatpush.msra.mxu0 %v86
    %281 = vmatpush.msra.mxu0 %v84
    %282 = vmatpush.msra.mxu0 %v82
    %283 = vmatpush.msra.mxu0 %v80
    %284 = vmatpush.msra.mxu0 %v78
    %285 = vmatpush.msra.mxu0 %v76
    %286 = vmatmul.f32.gmra.mxu0 %v38
    %v287 = vpop.f32.mrf.mxu0
    %v288 = vadd.f32 %v268, %v287
    %289 = vdwg.mxu0
    %290 = vmatpush.msra.mxu0 %v138
    %291 = vmatpush.msra.mxu0 %v136
    %292 = vmatpush.msra.mxu0 %v134
    %293 = vmatpush.msra.mxu0 %v132
    %294 = vmatpush.msra.mxu0 %v130
    %295 = vmatpush.msra.mxu0 %v128
    %296 = vmatpush.msra.mxu0 %v126
    %297 = vmatpush.msra.mxu0 %v124
    %298 = vmatpush.msra.mxu0 %v122
    %299 = vmatpush.msra.mxu0 %v120
    %300 = vmatpush.msra.mxu0 %v118
    %301 = vmatpush.msra.mxu0 %v116
    %302 = vmatpush.msra.mxu0 %v114
    %303 = vmatpush.msra.mxu0 %v112
    %304 = vmatpush.msra.mxu0 %v110
    %305 = vmatpush.msra.mxu0 %v108
    %306 = vmatmul.f32.gmra.mxu0 %v39
    %v307 = vpop.f32.mrf.mxu0
    %v308 = vadd.f32 %v288, %v307
    %309 = vdwg.mxu0
    %310 = vmatpush.msra.mxu0 %v170
    %311 = vmatpush.msra.mxu0 %v168
    %312 = vmatpush.msra.mxu0 %v166
    %313 = vmatpush.msra.mxu0 %v164
    %314 = vmatpush.msra.mxu0 %v162
    %315 = vmatpush.msra.mxu0 %v160
    %316 = vmatpush.msra.mxu0 %v158
    %317 = vmatpush.msra.mxu0 %v156
    %318 = vmatpush.msra.mxu0 %v154
    %319 = vmatpush.msra.mxu0 %v152
    %320 = vmatpush.msra.mxu0 %v150
    %321 = vmatpush.msra.mxu0 %v148
    %322 = vmatpush.msra.mxu0 %v146
    %323 = vmatpush.msra.mxu0 %v144
    %324 = vmatpush.msra.mxu0 %v142
    %325 = vmatpush.msra.mxu0 %v140
    %326 = vmatmul.f32.gmra.mxu0 %v40
    %v327 = vpop.f32.mrf.mxu0
    %v328 = vadd.f32 %v308, %v327
    %329 = vdwg.mxu0
    %330 = vmatpush.msra.mxu0 %v202
    %331 = vmatpush.msra.mxu0 %v200
    %332 = vmatpush.msra.mxu0 %v198
    %333 = vmatpush.msra.mxu0 %v196
    %334 = vmatpush.msra.mxu0 %v194
    %335 = vmatpush.msra.mxu0 %v192
    %336 = vmatpush.msra.mxu0 %v190
    %337 = vmatpush.msra.mxu0 %v188
    %338 = vmatpush.msra.mxu0 %v186
    %339 = vmatpush.msra.mxu0 %v184
    %340 = vmatpush.msra.mxu0 %v182
    %341 = vmatpush.msra.mxu0 %v180
    %342 = vmatpush.msra.mxu0 %v178
    %343 = vmatpush.msra.mxu0 %v176
    %344 = vmatpush.msra.mxu0 %v174
    %345 = vmatpush.msra.mxu0 %v172
    %346 = vmatmul.f32.gmra.mxu0 %v41
    %v347 = vpop.f32.mrf.mxu0
    %v348 = vadd.f32 %v328, %v347
    %349 = vdwg.mxu0
    %350 = vmatpush.msra.mxu0 %v234
    %351 = vmatpush.msra.mxu0 %v232
    %352 = vmatpush.msra.mxu0 %v230
    %353 = vmatpush.msra.mxu0 %v228
    %354 = vmatpush.msra.mxu0 %v226
    %355 = vmatpush.msra.mxu0 %v224
    %356 = vmatpush.msra.mxu0 %v222
    %357 = vmatpush.msra.mxu0 %v220
    %358 = vmatpush.msra.mxu0 %v218
    %359 = vmatpush.msra.mxu0 %v216
    %360 = vmatpush.msra.mxu0 %v214
    %361 = vmatpush.msra.mxu0 %v212
    %362 = vmatpush.msra.mxu0 %v210
    %363 = vmatpush.msra.mxu0 %v208
    %364 = vmatpush.msra.mxu0 %v206
    %365 = vmatpush.msra.mxu0 %v204
    %366 = vmatmul.f32.gmra.mxu0 %v42
    %v367 = vpop.f32.mrf.mxu0
    %v368 = vadd.f32 %v348, %v367
    %369 = vdwg.mxu0
    %370 = vmatpush.msra.mxu0 0.0
    %371 = vmatpush.msra.mxu0 0.0
    %372 = vmatpush.msra.mxu0 0.0
    %373 = vmatpush.msra.mxu0 0.0
    %374 = vmatpush.msra.mxu0 0.0
    %375 = vmatpush.msra.mxu0 0.0
    %376 = vmatpush.msra.mxu0 0.0
    %377 = vmatpush.msra.mxu0 0.0
    %378 = vmatpush.msra.mxu0 0.0
    %379 = vmatpush.msra.mxu0 0.0
    %380 = vmatpush.msra.mxu0 0.0
    %381 = vmatpush.msra.mxu0 0.0
    %382 = vmatpush.msra.mxu0 0.0
    %383 = vmatpush.msra.mxu0 0.0
    %384 = vmatpush.msra.mxu0 %v238
    %385 = vmatpush.msra.mxu0 %v236
    %386 = vmatmul.f32.gmra.mxu0 %v248
    %v387 = vpop.f32.mrf.mxu0
    %v388 = vadd.f32 %v368, %v387
    %389 = vdwg.mxu0
    %390 = vmatpush.msra.mxu0 %v75
    %391 = vmatpush.msra.mxu0 %v73
    %392 = vmatpush.msra.mxu0 %v71
    %393 = vmatpush.msra.mxu0 %v69
    %394 = vmatpush.msra.mxu0 %v67
    %395 = vmatpush.msra.mxu0 %v65
    %396 = vmatpush.msra.mxu0 %v63
    %397 = vmatpush.msra.mxu0 %v61
    %398 = vmatpush.msra.mxu0 %v59
    %399 = vmatpush.msra.mxu0 %v57
    %400 = vmatpush.msra.mxu0 %v55
    %401 = vmatpush.msra.mxu0 %v53
    %402 = vmatpush.msra.mxu0 %v51
    %403 = vmatpush.msra.mxu0 %v49
    %404 = vmatpush.msra.mxu0 %v47
    %405 = vmatpush.msra.mxu0 %v45
    %406 = vmatmul.f32.gmra.mxu0 %v37
    %v407 = vpop.f32.mrf.mxu0
    %v408 = vadd.f32 %v243, %v407
    %409 = vdwg.mxu0
    %410 = vmatpush.msra.mxu0 %v107
    %411 = vmatpush.msra.mxu0 %v105
    %412 = vmatpush.msra.mxu0 %v103
    %413 = vmatpush.msra.mxu0 %v101
    %414 = vmatpush.msra.mxu0 %v99
    %415 = vmatpush.msra.mxu0 %v97
    %416 = vmatpush.msra.mxu0 %v95
    %417 = vmatpush.msra.mxu0 %v93
    %418 = vmatpush.msra.mxu0 %v91
    %419 = vmatpush.msra.mxu0 %v89
    %420 = vmatpush.msra.mxu0 %v87
    %421 = vmatpush.msra.mxu0 %v85
    %422 = vmatpush.msra.mxu0 %v83
    %423 = vmatpush.msra.mxu0 %v81
    %424 = vmatpush.msra.mxu0 %v79
    %425 = vmatpush.msra.mxu0 %v77
    %426 = vmatmul.f32.gmra.mxu0 %v38
    %v427 = vpop.f32.mrf.mxu0
    %v428 = vadd.f32 %v408, %v427
    %429 = vdwg.mxu0
    %430 = vmatpush.msra.mxu0 %v139
    %431 = vmatpush.msra.mxu0 %v137
    %432 = vmatpush.msra.mxu0 %v135
    %433 = vmatpush.msra.mxu0 %v133
    %434 = vmatpush.msra.mxu0 %v131
    %435 = vmatpush.msra.mxu0 %v129
    %436 = vmatpush.msra.mxu0 %v127
    %437 = vmatpush.msra.mxu0 %v125
    %438 = vmatpush.msra.mxu0 %v123
    %439 = vmatpush.msra.mxu0 %v121
    %440 = vmatpush.msra.mxu0 %v119
    %441 = vmatpush.msra.mxu0 %v117
    %442 = vmatpush.msra.mxu0 %v115
    %443 = vmatpush.msra.mxu0 %v113
    %444 = vmatpush.msra.mxu0 %v111
    %445 = vmatpush.msra.mxu0 %v109
    %446 = vmatmul.f32.gmra.mxu0 %v39
    %v447 = vpop.f32.mrf.mxu0
    %v448 = vadd.f32 %v428, %v447
    %449 = vdwg.mxu0
    %450 = vmatpush.msra.mxu0 %v171
    %451 = vmatpush.msra.mxu0 %v169
    %452 = vmatpush.msra.mxu0 %v167
    %453 = vmatpush.msra.mxu0 %v165
    %454 = vmatpush.msra.mxu0 %v163
    %455 = vmatpush.msra.mxu0 %v161
    %456 = vmatpush.msra.mxu0 %v159
    %457 = vmatpush.msra.mxu0 %v157
    %458 = vmatpush.msra.mxu0 %v155
    %459 = vmatpush.msra.mxu0 %v153
    %460 = vmatpush.msra.mxu0 %v151
    %461 = vmatpush.msra.mxu0 %v149
    %462 = vmatpush.msra.mxu0 %v147
    %463 = vmatpush.msra.mxu0 %v145
    %464 = vmatpush.msra.mxu0 %v143
    %465 = vmatpush.msra.mxu0 %v141
    %466 = vmatmul.f32.gmra.mxu0 %v40
    %v467 = vpop.f32.mrf.mxu0
    %v468 = vadd.f32 %v448, %v467
    %469 = vdwg.mxu0
    %470 = vmatpush.msra.mxu0 %v203
    %471 = vmatpush.msra.mxu0 %v201
    %472 = vmatpush.msra.mxu0 %v199
    %473 = vmatpush.msra.mxu0 %v197
    %474 = vmatpush.msra.mxu0 %v195
    %475 = vmatpush.msra.mxu0 %v193
    %476 = vmatpush.msra.mxu0 %v191
    %477 = vmatpush.msra.mxu0 %v189
    %478 = vmatpush.msra.mxu0 %v187
    %479 = vmatpush.msra.mxu0 %v185
    %480 = vmatpush.msra.mxu0 %v183
    %481 = vmatpush.msra.mxu0 %v181
    %482 = vmatpush.msra.mxu0 %v179
    %483 = vmatpush.msra.mxu0 %v177
    %484 = vmatpush.msra.mxu0 %v175
    %485 = vmatpush.msra.mxu0 %v173
    %486 = vmatmul.f32.gmra.mxu0 %v41
    %v487 = vpop.f32.mrf.mxu0
    %v488 = vadd.f32 %v468, %v487
    %489 = vdwg.mxu0
    %490 = vmatpush.msra.mxu0 %v235
    %491 = vmatpush.msra.mxu0 %v233
    %492 = vmatpush.msra.mxu0 %v231
    %493 = vmatpush.msra.mxu0 %v229
    %494 = vmatpush.msra.mxu0 %v227
    %495 = vmatpush.msra.mxu0 %v225
    %496 = vmatpush.msra.mxu0 %v223
    %497 = vmatpush.msra.mxu0 %v221
    %498 = vmatpush.msra.mxu0 %v219
    %499 = vmatpush.msra.mxu0 %v217
    %500 = vmatpush.msra.mxu0 %v215
    %501 = vmatpush.msra.mxu0 %v213
    %502 = vmatpush.msra.mxu0 %v211
    %503 = vmatpush.msra.mxu0 %v209
    %504 = vmatpush.msra.mxu0 %v207
    %505 = vmatpush.msra.mxu0 %v205
    %506 = vmatmul.f32.gmra.mxu0 %v42
    %v507 = vpop.f32.mrf.mxu0
    %v508 = vadd.f32 %v488, %v507
    %509 = vdwg.mxu0
    %510 = vmatpush.msra.mxu0 0.0
    %511 = vmatpush.msra.mxu0 0.0
    %512 = vmatpush.msra.mxu0 0.0
    %513 = vmatpush.msra.mxu0 0.0
    %514 = vmatpush.msra.mxu0 0.0
    %515 = vmatpush.msra.mxu0 0.0
    %516 = vmatpush.msra.mxu0 0.0
    %517 = vmatpush.msra.mxu0 0.0
    %518 = vmatpush.msra.mxu0 0.0
    %519 = vmatpush.msra.mxu0 0.0
    %520 = vmatpush.msra.mxu0 0.0
    %521 = vmatpush.msra.mxu0 0.0
    %522 = vmatpush.msra.mxu0 0.0
    %523 = vmatpush.msra.mxu0 0.0
    %524 = vmatpush.msra.mxu0 %v239
    %525 = vmatpush.msra.mxu0 %v237
    %526 = vmatmul.f32.gmra.mxu0 %v248
    %v527 = vpop.f32.mrf.mxu0
    %v528 = vadd.f32 %v508, %v527
    %529 = vdwg.mxu0
    %v530 = vmax.f32 %v388, 0.0
    %v531 = vmax.f32 %v528, 0.0
    %v532 = vld [vmem:[%s3] sm:$0xff]
    %v533 = vld [vmem:[%s3 + $0x8] sm:$0xff]
    %v534 = vld [vmem:[%s3 + $0x10] sm:$0xff]
    %v535 = vld [vmem:[%s3 + $0x18] sm:$0xff]
    %v536 = vld [vmem:[%s3 + $0x20] sm:$0xff]
    %v537 = vld [vmem:[%s3 + $0x28] sm:$0xff]
    %v538 = vld [vmem:[%s3 + $0x30] sm:$0xff]
    %v539 = vld [vmem:[%s3 + $0x38] sm:$0xff]
    %v540 = vld [vmem:[%s3 + $0x40] sm:$0xff]
    %v541 = vld [vmem:[%s3 + $0x48] sm:$0xff]
    %v542 = vld [vmem:[%s3 + $0x50] sm:$0xff]
    %v543 = vld [vmem:[%s3 + $0x58] sm:$0xff]
    %v544 = vld [vmem:[%s3 + $0x60] sm:$0xff]
    %v545 = vld [vmem:[%s3 + $0x68] sm:$0xff]
    %v546 = vld [vmem:[%s3 + $0x70] sm:$0xff]
    %v547 = vld [vmem:[%s3 + $0x78] sm:$0xff]
    %v548 = vld [vmem:[%s3 + $0x80] sm:$0xff]
    %v549 = vld [vmem:[%s3 + $0x88] sm:$0xff]
    %v550 = vld [vmem:[%s3 + $0x90] sm:$0xff]
    %v551 = vld [vmem:[%s3 + $0x98] sm:$0xff]
    %v552 = vld [vmem:[%s3 + $0xa0] sm:$0xff]
    %v553 = vld [vmem:[%s3 + $0xa8] sm:$0xff]
    %v554 = vld [vmem:[%s3 + $0xb0] sm:$0xff]
    %v555 = vld [vmem:[%s3 + $0xb8] sm:$0xff]
    %v556 = vld [vmem:[%s3 + $0xc0] sm:$0xff]
    %v557 = vld [vmem:[%s3 + $0xc8] sm:$0xff]
    %v558 = vld [vmem:[%s3 + $0xd0] sm:$0xff]
    %v559 = vld [vmem:[%s3 + $0xd8] sm:$0xff]
    %v560 = vld [vmem:[%s3 + $0xe0] sm:$0xff]
    %v561 = vld [vmem:[%s3 + $0xe8] sm:$0xff]
    %v562 = vld [vmem:[%s3 + $0xf0] sm:$0xff]
    %v563 = vld [vmem:[%s3 + $0xf8] sm:$0xff]
    %v564 = vld [vmem:[%s4] sm:$0x1]
    %v566 = vperm.slane %v564, 0
    %568 = vmatpush.msra.mxu0 %v547
    %569 = vmatpush.msra.mxu0 %v546
    %570 = vmatpush.msra.mxu0 %v545
    %571 = vmatpush.msra.mxu0 %v544
    %572 = vmatpush.msra.mxu0 %v543
    %573 = vmatpush.msra.mxu0 %v542
    %574 = vmatpush.msra.mxu0 %v541
    %575 = vmatpush.msra.mxu0 %v540
    %576 = vmatpush.msra.mxu0 %v539
    %577 = vmatpush.msra.mxu0 %v538
    %578 = vmatpush.msra.mxu0 %v537
    %579 = vmatpush.msra.mxu0 %v536
    %580 = vmatpush.msra.mxu0 %v535
    %581 = vmatpush.msra.mxu0 %v534
    %582 = vmatpush.msra.mxu0 %v533
    %583 = vmatpush.msra.mxu0 %v532
    %584 = vmatmul.f32.gmra.mxu0 %v530
    %v585 = vpop.f32.mrf.mxu0
    %v586 = vadd.f32 %v566, %v585
    %587 = vdwg.mxu0
    %588 = vmatpush.msra.mxu0 %v563
    %589 = vmatpush.msra.mxu0 %v562
    %590 = vmatpush.msra.mxu0 %v561
    %591 = vmatpush.msra.mxu0 %v560
    %592 = vmatpush.msra.mxu0 %v559
    %593 = vmatpush.msra.mxu0 %v558
    %594 = vmatpush.msra.mxu0 %v557
    %595 = vmatpush.msra.mxu0 %v556
    %596 = vmatpush.msra.mxu0 %v555
    %597 = vmatpush.msra.mxu0 %v554
    %598 = vmatpush.msra.mxu0 %v553
    %599 = vmatpush.msra.mxu0 %v552
    %600 = vmatpush.msra.mxu0 %v551
    %601 = vmatpush.msra.mxu0 %v550
    %602 = vmatpush.msra.mxu0 %v549
    %603 = vmatpush.msra.mxu0 %v548
    %604 = vmatmul.f32.gmra.mxu0 %v531
    %v605 = vpop.f32.mrf.mxu0
    %v606 = vadd.f32 %v586, %v605
    %607 = vdwg.mxu0
    %608 = vst [vmem:[#allocation5] sm:$0xff] %v606
    // Predicated region
    $region26: #{simple_net_forward.1} parent=1 // pred_check
      _
    $region27: #{simple_net_forward.1} parent=1 // pred_check_branch
      %610 = sbr.rel (0) target = $region29
    $region28: #{simple_net_forward.1} parent=1 // pred_region
      %612 = vsyncadd [#allocation4], 0
      %s614 = sshll.u32 [#allocation5], 4
      %s615 = int_to_ptr.vmem [resolvable:$true] %s614
      %s616 = sshll.u32 %s5, 4
      %s617 = int_to_ptr.hbm [resolvable:$true] %s616
      %619 = dma.vmem_to_hbm [thread:$0]  %s615, 128, %s617, [#allocation4]
    $region29: #{simple_net_forward.1} parent=1 // pred_fallthru
      _
    // Predicated region
    $region30: #{simple_net_forward.1} parent=1 // pred_check
      _
    $region31: #{simple_net_forward.1} parent=1 // pred_check_branch
      %621 = sbr.rel (0) target = $region33
    $region32: #{simple_net_forward.1} parent=1 // pred_region
      %623 = dma.done [#allocation4], 128
    $region33: #{simple_net_forward.1} parent=1 // pred_fallthru
      _
    %624 = vsyncpa [#allocation3], 1
    %625 = vsyncpa [#allocation4], 1

</llo_original>
